<compile_context>
chip_gen: v6e
topology: v6e:2x2x1
jax: 0.10.0
libtpu: 0.0.40
codegen_flags: <defaults>
</compile_context>

<pallas_src>
import functools

import jax
import jax.numpy as jnp
from jax.experimental import pallas as pl
from jax.experimental.pallas import tpu as pltpu


_VMEM_LIMIT = 32 * 1024 * 1024          # safe on v5e/v6e (128 MiB) and v7x (64 MiB)
_NODE_TILE = 256                        # node-axis tile (rows)
_EDGE_TILE = 512                        # edge-axis tile (rows)
_VMEM_SPEC = pl.BlockSpec(memory_space=pltpu.MemorySpace.VMEM)


def _round_up(x, m):
    return ((x + m - 1) // m) * m


# ---------------------------------------------------------------------------
# in-kernel math helpers (f32 elementwise; EUP-friendly)
# ---------------------------------------------------------------------------
def _softplus(x):
    # numerically stable softplus = log(1 + exp(x))
    return jnp.maximum(x, 0.0) + jnp.log(1.0 + jnp.exp(-jnp.abs(x)))


def _sigmoid(x):
    # reciprocal on the EUP slot (approx) keeps the VPU free
    return pl.reciprocal(1.0 + jnp.exp(-x), approx=True)


# ---------------------------------------------------------------------------
# Kernel 1: embedding linear  y = x @ w + b   (tiled over nodes, bf16 MXU)
# ---------------------------------------------------------------------------
def _embed_kernel(x_ref, w_ref, b_ref, o_ref):
    o_ref[...] = (
        jnp.dot(x_ref[...], w_ref[...], preferred_element_type=jnp.float32)
        + b_ref[...]
    )


def embed_call(x_bf16, w_bf16, b_f32, tn):
    n_pad, fin = x_bf16.shape
    fout = w_bf16.shape[1]
    return pl.pallas_call(
        _embed_kernel,
        out_shape=jax.ShapeDtypeStruct((n_pad, fout), jnp.float32),
        grid=(n_pad // tn,),
        in_specs=[
            pl.BlockSpec((tn, fin), lambda i: (i, 0)),
            pl.BlockSpec((fin, fout), lambda i: (0, 0)),
            pl.BlockSpec((1, fout), lambda i: (0, 0)),
        ],
        out_specs=pl.BlockSpec((tn, fout), lambda i: (i, 0)),
        compiler_params=pltpu.CompilerParams(
            dimension_semantics=("parallel",),
            vmem_limit_bytes=_VMEM_LIMIT,
        ),
    )(x_bf16, w_bf16, b_f32)


# ---------------------------------------------------------------------------
# Kernel 2: CGConv message kernel, tiled over edges.
#   pre = x_i @ W_dst + x_j @ W_src + e @ W_edge + b     (lane-dense 2F output)
#   msg = sigmoid(pre[:, :F]) * softplus(pre[:, F:])
# ---------------------------------------------------------------------------
def _message_kernel(xi_ref, xj_ref, ea_ref, wd_ref, wsrc_ref, wedge_ref, b_ref,
                    o_ref):
    f_len = wd_ref.shape[0]
    pre = jnp.dot(xi_ref[...], wd_ref[...], preferred_element_type=jnp.float32)
    pre = pre + jnp.dot(xj_ref[...], wsrc_ref[...],
                        preferred_element_type=jnp.float32)
    pre = pre + jnp.dot(ea_ref[...], wedge_ref[...],
                        preferred_element_type=jnp.float32)
    pre = pre + b_ref[...]
    gate = _sigmoid(pre[:, :f_len])
    core = _softplus(pre[:, f_len:])
    o_ref[...] = gate * core


def message_call(x_i, x_j, ea, conv_p, te):
    e_pad, f = x_i.shape
    d = ea.shape[1]
    return pl.pallas_call(
        _message_kernel,
        out_shape=jax.ShapeDtypeStruct((e_pad, f), jnp.float32),
        grid=(e_pad // te,),
        in_specs=[
            pl.BlockSpec((te, f), lambda i: (i, 0)),
            pl.BlockSpec((te, f), lambda i: (i, 0)),
            pl.BlockSpec((te, d), lambda i: (i, 0)),
            pl.BlockSpec((f, 2 * f), lambda i: (0, 0)),
            pl.BlockSpec((f, 2 * f), lambda i: (0, 0)),
            pl.BlockSpec((d, 2 * f), lambda i: (0, 0)),
            pl.BlockSpec((1, 2 * f), lambda i: (0, 0)),
        ],
        out_specs=pl.BlockSpec((te, f), lambda i: (i, 0)),
        compiler_params=pltpu.CompilerParams(
            dimension_semantics=("parallel",),
            vmem_limit_bytes=_VMEM_LIMIT,
        ),
    )(x_i, x_j, ea, conv_p["wd"], conv_p["wsrc"], conv_p["wedge"], conv_p["b"])


# ---------------------------------------------------------------------------
# Kernel 3: BatchNorm statistics (sum / sum-of-squares), tiled over nodes,
#           resident (2, F) accumulator with pl.when init.
#           Zero-padded node rows contribute 0, so padding is harmless.
# ---------------------------------------------------------------------------
def _bn_stats_kernel(agg_ref, stats_ref):
    @pl.when(pl.program_id(0) == 0)
    def _():
        stats_ref[...] = jnp.zeros_like(stats_ref)

    a = agg_ref[...]
    stats_ref[0:1, :] += jnp.sum(a, axis=0, keepdims=True)
    stats_ref[1:2, :] += jnp.sum(a * a, axis=0, keepdims=True)


def bn_stats_call(agg, tn):
    n_pad, f = agg.shape
    return pl.pallas_call(
        _bn_stats_kernel,
        out_shape=jax.ShapeDtypeStruct((2, f), jnp.float32),
        grid=(n_pad // tn,),
        in_specs=[pl.BlockSpec((tn, f), lambda i: (i, 0))],
        out_specs=pl.BlockSpec((2, f), lambda i: (0, 0)),
        compiler_params=pltpu.CompilerParams(
            dimension_semantics=("arbitrary",),
            vmem_limit_bytes=_VMEM_LIMIT,
        ),
    )(agg)


# ---------------------------------------------------------------------------
# Kernel 4: BatchNorm normalize + affine + residual, tiled over nodes.
#           Output aliases the residual input x (in-place update of x).
# ---------------------------------------------------------------------------
def _bn_residual_kernel(agg_ref, x_ref, stats_ref, gamma_ref, beta_ref, o_ref,
                        *, inv_n):
    mean = stats_ref[0:1, :] * inv_n
    var = stats_ref[1:2, :] * inv_n - mean * mean
    a = agg_ref[...]
    bn = (a - mean) * jax.lax.rsqrt(var + 1e-5) * gamma_ref[...] + beta_ref[...]
    o_ref[...] = bn + x_ref[...]


def bn_residual_call(agg, x, stats, gamma, beta, n_true, tn):
    n_pad, f = agg.shape
    kern = functools.partial(_bn_residual_kernel, inv_n=1.0 / float(n_true))
    return pl.pallas_call(
        kern,
        out_shape=jax.ShapeDtypeStruct((n_pad, f), jnp.float32),
        grid=(n_pad // tn,),
        in_specs=[
            pl.BlockSpec((tn, f), lambda i: (i, 0)),
            pl.BlockSpec((tn, f), lambda i: (i, 0)),
            pl.BlockSpec((2, f), lambda i: (0, 0)),
            pl.BlockSpec((1, f), lambda i: (0, 0)),
            pl.BlockSpec((1, f), lambda i: (0, 0)),
        ],
        out_specs=pl.BlockSpec((tn, f), lambda i: (i, 0)),
        input_output_aliases={1: 0},          # residual x written back in place
        compiler_params=pltpu.CompilerParams(
            dimension_semantics=("parallel",),
            vmem_limit_bytes=_VMEM_LIMIT,
        ),
    )(agg, x, stats, gamma, beta)


# ---------------------------------------------------------------------------
# Kernel 5: readout head.
#   out = fc_out(softplus(fc1(softplus(pooled))))
#   fc_out (hidden -> 1) runs as a VPU/XLU reduction, not a width-1 MXU matmul.
#   Tiny (G x hidden) problem -> single full-VMEM invocation.
# ---------------------------------------------------------------------------
def _head_kernel(pooled_ref, w1_ref, b1_ref, w2_ref, b2_ref, o_ref):
    h = _softplus(pooled_ref[...])
    h = jnp.dot(h.astype(jnp.bfloat16), w1_ref[...],
                preferred_element_type=jnp.float32) + b1_ref[...]
    h = _softplus(h)
    o_ref[...] = jnp.sum(h * w2_ref[...], axis=-1, keepdims=True) + b2_ref[...]


def head_call(pooled, w1, b1, w2_row, b2):
    g = pooled.shape[0]
    return pl.pallas_call(
        _head_kernel,
        out_shape=jax.ShapeDtypeStruct((g, 1), jnp.float32),
        in_specs=[_VMEM_SPEC] * 5,
        out_specs=_VMEM_SPEC,
        compiler_params=pltpu.CompilerParams(vmem_limit_bytes=_VMEM_LIMIT),
    )(pooled, w1, b1, w2_row, b2)


# ---------------------------------------------------------------------------
# Parameter construction (PyTorch-Linear-style uniform init, BN reset).
# Conv gate/core weights are fused along the output axis and pre-split into
# (dst | src | edge) row blocks; MXU weights stored in bf16, the rest in f32.
# ---------------------------------------------------------------------------
def _init_linear(key, fan_in, fan_out):
    k1, k2 = jax.random.split(key)
    bound = 1.0 / jnp.sqrt(jnp.float32(fan_in))
    w = jax.random.uniform(k1, (fan_in, fan_out), jnp.float32, -bound, bound)
    b = jax.random.uniform(k2, (1, fan_out), jnp.float32, -bound, bound)
    return w, b


def init_cgcnn_params(key, orig_node_fea_len, node_fea_len, edge_fea_len,
                      num_conv_layer, hidden_layer_len):
    keys = jax.random.split(key, 3 + 2 * num_conv_layer)
    params = {}

    emb_w, emb_b = _init_linear(keys[0], orig_node_fea_len, node_fea_len)
    params["emb_w"] = emb_w.astype(jnp.bfloat16)
    params["emb_b"] = emb_b

    zdim = 2 * node_fea_len + edge_fea_len
    convs = []
    for l in range(num_conv_layer):
        wf, bf = _init_linear(keys[1 + 2 * l], zdim, node_fea_len)
        ws, bs = _init_linear(keys[2 + 2 * l], zdim, node_fea_len)
        w_fused = jnp.concatenate([wf, ws], axis=1)      # (zdim, 2F)
        b_fused = jnp.concatenate([bf, bs], axis=1)      # (1, 2F)
        convs.append(dict(
            wd=w_fused[:node_fea_len].astype(jnp.bfloat16),                 # x_i rows
            wsrc=w_fused[node_fea_len:2 * node_fea_len].astype(jnp.bfloat16),  # x_j rows
            wedge=w_fused[2 * node_fea_len:].astype(jnp.bfloat16),          # edge rows
            b=b_fused,
            gamma=jnp.ones((1, node_fea_len), jnp.float32),   # BN reset: weight=1
            beta=jnp.zeros((1, node_fea_len), jnp.float32),   # BN reset: bias=0
        ))
    params["convs"] = convs

    fc1_w, fc1_b = _init_linear(keys[1 + 2 * num_conv_layer],
                                node_fea_len, hidden_layer_len)
    params["fc1_w"] = fc1_w.astype(jnp.bfloat16)
    params["fc1_b"] = fc1_b
    fc2_w, fc2_b = _init_linear(keys[2 + 2 * num_conv_layer],
                                hidden_layer_len, 1)
    params["fc2_w_row"] = fc2_w.T        # (1, hidden) f32 -> VPU reduction path
    params["fc2_b"] = fc2_b              # (1, 1)
    return params


# ---------------------------------------------------------------------------
# Full forward pass (regression variant, classification=False)
# ---------------------------------------------------------------------------
def cgcnn_forward(params, node_fea, edge_index, edge_attr, batch, num_graphs):
    n = node_fea.shape[0]
    e = edge_attr.shape[0]

    tn = min(_NODE_TILE, _round_up(n, 8))
    n_pad = _round_up(n, tn)
    te = min(_EDGE_TILE, _round_up(e, 8))
    e_pad = _round_up(e, te)

    src = edge_index[0].astype(jnp.int32)
    dst = edge_index[1].astype(jnp.int32)
    src_p = jnp.pad(src, (0, e_pad - e))                       # padded edges gather row 0,
    dst_p = jnp.pad(dst, (0, e_pad - e))                       # their messages are sliced off
    ea_p = jnp.pad(edge_attr, ((0, e_pad - e), (0, 0))).astype(jnp.bfloat16)

    # embedding (tiled over nodes, bf16 MXU, f32 output)
    x_in = jnp.pad(node_fea, ((0, n_pad - n), (0, 0))).astype(jnp.bfloat16)
    x = embed_call(x_in, params["emb_w"], params["emb_b"], tn)   # (n_pad, F) f32

    # conv stack: message kernel (edges) -> segment-sum -> BN stats -> BN+residual
    # TODO(synk): for large graphs keep x resident in VMEM across all conv layers
    # inside one pallas_call (in-kernel gather/scatter) to remove per-layer HBM
    # round trips of x.
    for conv_p in params["convs"]:
        x_bf = x.astype(jnp.bfloat16)
        x_i = jnp.take(x_bf, dst_p, axis=0)      # target-node rows (E_pad, F)
        x_j = jnp.take(x_bf, src_p, axis=0)      # source-node rows (E_pad, F)
        msgs = message_call(x_i, x_j, ea_p, conv_p, te)            # (E_pad, F) f32
        agg = jax.ops.segment_sum(msgs[:e], dst, num_segments=n_pad)  # scatter-add
        stats = bn_stats_call(agg, tn)                             # (2, F) sum / sumsq
        x = bn_residual_call(agg, x, stats, conv_p["gamma"], conv_p["beta"], n, tn)

    # global mean pool (segment mean; plain-JAX glue)
    xv = x[:n]
    pooled = jax.ops.segment_sum(xv, batch, num_segments=num_graphs)
    cnt = jax.ops.segment_sum(jnp.ones((n,), jnp.float32), batch,
                              num_segments=num_graphs)
    pooled = pooled / jnp.maximum(cnt, 1.0)[:, None]

    # softplus -> fc1 -> softplus -> fc_out (fused head kernel)
    return head_call(pooled, params["fc1_w"], params["fc1_b"],
                     params["fc2_w_row"], params["fc2_b"])


# ---------------------------------------------------------------------------
if __name__ == "__main__":
    key = jax.random.PRNGKey(0)

    # small synthetic graph batch
    orig_node_fea_len = 16
    node_fea_len = 64          # fused gate|core output = 128 lanes (lane-dense)
    edge_fea_len = 16
    hidden_layer_len = 128
    num_conv_layer = 3

    num_nodes = 16             # 8 nodes per graph
    num_graphs = 2
    edges_per_graph = 16
    num_edges = edges_per_graph * num_graphs

    k_x, k_e, k_s0, k_d0, k_s1, k_d1, k_p = jax.random.split(key, 7)

    node_fea = jax.random.normal(k_x, (num_nodes, orig_node_fea_len), jnp.float32)
    edge_attr = jax.random.normal(k_e, (num_edges, edge_fea_len), jnp.float32)

    # edges confined to their own graph (graph 0 -> nodes [0,8), graph 1 -> [8,16))
    src0 = jax.random.randint(k_s0, (edges_per_graph,), 0, 8)
    dst0 = jax.random.randint(k_d0, (edges_per_graph,), 0, 8)
    src1 = jax.random.randint(k_s1, (edges_per_graph,), 8, 16)
    dst1 = jax.random.randint(k_d1, (edges_per_graph,), 8, 16)
    edge_index = jnp.stack(
        [jnp.concatenate([src0, src1]), jnp.concatenate([dst0, dst1])], axis=0
    ).astype(jnp.int32)                                    # (2, E)

    batch = jnp.concatenate(
        [jnp.zeros((8,), jnp.int32), jnp.ones((8,), jnp.int32)]
    )                                                      # (N,)

    params = init_cgcnn_params(
        k_p, orig_node_fea_len, node_fea_len, edge_fea_len,
        num_conv_layer, hidden_layer_len,
    )

    fwd = jax.jit(cgcnn_forward, static_argnames=("num_graphs",))
    out = fwd(params, node_fea, edge_index, edge_attr, batch,
              num_graphs=num_graphs)
    out = jax.block_until_ready(out)
    assert out.shape == (num_graphs, 1)
    assert bool(jnp.all(jnp.isfinite(out)))
    print("KERNEL_OK")
</pallas_src>

<mosaic_0001>
module attributes {stable_mosaic.version = 11 : i64} {
  func.func private @main(%arg0: i32) attributes {dimension_semantics = [#tpu.dimension_semantics<core_parallel>], iteration_bounds = array<i64: 2>, tpu.core_type = #tpu.core_type<sc_scalar_subcore>, window_params = []} {
    return
  }
}

module attributes {stable_mosaic.version = 11 : i64} {
  func.func private @main(%arg0: i32) attributes {dimension_semantics = [#tpu.dimension_semantics<core_parallel>], iteration_bounds = array<i64: 2>, tpu.core_type = #tpu.core_type<sc_scalar_subcore>, window_params = []} {
    return
  }
}

module attributes {stable_mosaic.version = 11 : i64} {
  func.func @_embed_kernel(%arg0: i32, %arg1: memref<16x16xbf16, #tpu.memory_space<vmem>>, %arg2: memref<16x64xbf16, #tpu.memory_space<vmem>>, %arg3: memref<1x64xf32, #tpu.memory_space<vmem>>, %arg4: memref<16x64xf32, #tpu.memory_space<vmem>>) attributes {dimension_semantics = [#tpu.dimension_semantics<parallel>], iteration_bounds = array<i64: 1>, scalar_prefetch = 0 : i64, scratch_operands = 0 : i64, tpu.core_type = #tpu.core_type<tc>, window_params = [{transform_indices = @transform_0, window_bounds = array<i64: 16, 16>}, {pipeline_mode = #tpu.pipeline_mode<synchronous>, transform_indices = @transform_1, window_bounds = array<i64: 16, 64>}, {pipeline_mode = #tpu.pipeline_mode<synchronous>, transform_indices = @transform_2, window_bounds = array<i64: 1, 64>}, {transform_indices = @transform_3, window_bounds = array<i64: 16, 64>}]} {
    %c0 = arith.constant 0 : index
    %c0_0 = arith.constant 0 : index
    %0 = vector.load %arg1[%c0, %c0_0] : memref<16x16xbf16, #tpu.memory_space<vmem>>, vector<16x16xbf16>
    %c0_1 = arith.constant 0 : index
    %c0_2 = arith.constant 0 : index
    %1 = vector.load %arg2[%c0_1, %c0_2] : memref<16x64xbf16, #tpu.memory_space<vmem>>, vector<16x64xbf16>
    %cst = arith.constant dense<0.000000e+00> : vector<16x64xf32>
    %2 = tpu.matmul %0, %1, %cst {dimension_numbers = #tpu.dot_dimension_numbers<[1], [0], [0], [1], [0, 0, 1, 1], [], []>} : vector<16x16xbf16>, vector<16x64xbf16>, vector<16x64xf32> -> vector<16x64xf32>
    %c0_3 = arith.constant 0 : index
    %c0_4 = arith.constant 0 : index
    %3 = vector.load %arg3[%c0_3, %c0_4] : memref<1x64xf32, #tpu.memory_space<vmem>>, vector<1x64xf32>
    %4 = vector.broadcast %3 : vector<1x64xf32> to vector<16x64xf32>
    %5 = arith.addf %2, %4 : vector<16x64xf32>
    %c0_5 = arith.constant 0 : index
    %c0_6 = arith.constant 0 : index
    %6 = vector.load %arg4[%c0_5, %c0_6] : memref<16x64xf32, #tpu.memory_space<vmem>>, vector<16x64xf32>
    tpu.vector_store %arg4[%c0_5, %c0_6], %5 {strides = array<i32>} : memref<16x64xf32, #tpu.memory_space<vmem>>, vector<16x64xf32>,
    return
  }
  func.func @transform_0(%arg0: i32) -> (i32, i32) {
    %c0_i32 = arith.constant 0 : i32
    %c0_i32_0 = arith.constant 0 : i32
    return %arg0, %c0_i32 : i32, i32
  }
  func.func @transform_1(%arg0: i32) -> (i32, i32) {
    %c0_i32 = arith.constant 0 : i32
    %c0_i32_0 = arith.constant 0 : i32
    %c0_i32_1 = arith.constant 0 : i32
    return %c0_i32, %c0_i32_0 : i32, i32
  }
  func.func @transform_2(%arg0: i32) -> (i32, i32) {
    %c0_i32 = arith.constant 0 : i32
    %c0_i32_0 = arith.constant 0 : i32
    %c0_i32_1 = arith.constant 0 : i32
    return %c0_i32, %c0_i32_0 : i32, i32
  }
  func.func @transform_3(%arg0: i32) -> (i32, i32) {
    %c0_i32 = arith.constant 0 : i32
    %c0_i32_0 = arith.constant 0 : i32
    return %arg0, %c0_i32 : i32, i32
  }
}

module attributes {stable_mosaic.version = 11 : i64} {
  func.func @_bn_stats_kernel(%arg0: i32, %arg1: memref<16x64xf32, #tpu.memory_space<vmem>>, %arg2: memref<2x64xf32, #tpu.memory_space<vmem>>) attributes {dimension_semantics = [#tpu.dimension_semantics<arbitrary>], iteration_bounds = array<i64: 1>, scalar_prefetch = 0 : i64, scratch_operands = 0 : i64, tpu.core_type = #tpu.core_type<tc>, window_params = [{transform_indices = @transform_0, window_bounds = array<i64: 16, 64>}, {pipeline_mode = #tpu.pipeline_mode<synchronous>, transform_indices = @transform_1, window_bounds = array<i64: 2, 64>}]} {
    %c0_i32 = arith.constant 0 : i32
    %0 = arith.cmpi eq, %arg0, %c0_i32 : i32
    %1 = arith.extui %0 : i1 to i32
    %c0_i32_0 = arith.constant 0 : i32
    %2 = arith.cmpi ne, %1, %c0_i32_0 : i32
    scf.if %2 {
      %cst_10 = arith.constant 0.000000e+00 : f32
      %15 = vector.broadcast %cst_10 : f32 to vector<2x64xf32>
      %c0_11 = arith.constant 0 : index
      %c0_12 = arith.constant 0 : index
      %16 = vector.load %arg2[%c0_11, %c0_12] : memref<2x64xf32, #tpu.memory_space<vmem>>, vector<2x64xf32>
      tpu.vector_store %arg2[%c0_11, %c0_12], %15 {strides = array<i32>} : memref<2x64xf32, #tpu.memory_space<vmem>>, vector<2x64xf32>,
    } else {
    }
    %c0 = arith.constant 0 : index
    %c0_1 = arith.constant 0 : index
    %3 = vector.load %arg1[%c0, %c0_1] : memref<16x64xf32, #tpu.memory_space<vmem>>, vector<16x64xf32>
    %c0_2 = arith.constant 0 : index
    %c0_3 = arith.constant 0 : index
    %4 = vector.load %arg2[%c0_2, %c0_3] : memref<2x64xf32, #tpu.memory_space<vmem>>, vector<1x64xf32>
    %cst = arith.constant dense<0.000000e+00> : vector<64xf32>
    %5 = vector.multi_reduction <add>, %3, %cst [0] : vector<16x64xf32> to vector<64xf32>
    %6 = vector.shape_cast %5 : vector<64xf32> to vector<1x64xf32>
    %7 = arith.addf %4, %6 : vector<1x64xf32>
    %c0_4 = arith.constant 0 : index
    %c0_5 = arith.constant 0 : index
    %8 = vector.load %arg2[%c0_4, %c0_5] : memref<2x64xf32, #tpu.memory_space<vmem>>, vector<1x64xf32>
    tpu.vector_store %arg2[%c0_4, %c0_5], %7 {strides = array<i32>} : memref<2x64xf32, #tpu.memory_space<vmem>>, vector<1x64xf32>,
    %c1 = arith.constant 1 : index
    %c0_6 = arith.constant 0 : index
    %9 = vector.load %arg2[%c1, %c0_6] : memref<2x64xf32, #tpu.memory_space<vmem>>, vector<1x64xf32>
    %10 = arith.mulf %3, %3 : vector<16x64xf32>
    %cst_7 = arith.constant dense<0.000000e+00> : vector<64xf32>
    %11 = vector.multi_reduction <add>, %10, %cst_7 [0] : vector<16x64xf32> to vector<64xf32>
    %12 = vector.shape_cast %11 : vector<64xf32> to vector<1x64xf32>
    %13 = arith.addf %9, %12 : vector<1x64xf32>
    %c1_8 = arith.constant 1 : index
    %c0_9 = arith.constant 0 : index
    %14 = vector.load %arg2[%c1_8, %c0_9] : memref<2x64xf32, #tpu.memory_space<vmem>>, vector<1x64xf32>
    tpu.vector_store %arg2[%c1_8, %c0_9], %13 {strides = array<i32>} : memref<2x64xf32, #tpu.memory_space<vmem>>, vector<1x64xf32>,
    return
  }
  func.func @transform_0(%arg0: i32) -> (i32, i32) {
    %c0_i32 = arith.constant 0 : i32
    %c0_i32_0 = arith.constant 0 : i32
    return %arg0, %c0_i32 : i32, i32
  }
  func.func @transform_1(%arg0: i32) -> (i32, i32) {
    %c0_i32 = arith.constant 0 : i32
    %c0_i32_0 = arith.constant 0 : i32
    %c0_i32_1 = arith.constant 0 : i32
    return %c0_i32, %c0_i32_0 : i32, i32
  }
}

module attributes {stable_mosaic.version = 11 : i64} {
  func.func @_bn_residual_kernel(%arg0: i32, %arg1: memref<16x64xf32, #tpu.memory_space<vmem>>, %arg2: memref<16x64xf32, #tpu.memory_space<vmem>>, %arg3: memref<2x64xf32, #tpu.memory_space<vmem>>, %arg4: memref<1x64xf32, #tpu.memory_space<vmem>>, %arg5: memref<1x64xf32, #tpu.memory_space<vmem>>, %arg6: memref<16x64xf32, #tpu.memory_space<vmem>>) attributes {dimension_semantics = [#tpu.dimension_semantics<parallel>], iteration_bounds = array<i64: 1>, scalar_prefetch = 0 : i64, scratch_operands = 0 : i64, tpu.core_type = #tpu.core_type<tc>, window_params = [{transform_indices = @transform_0, window_bounds = array<i64: 16, 64>}, {transform_indices = @transform_1, window_bounds = array<i64: 16, 64>}, {pipeline_mode = #tpu.pipeline_mode<synchronous>, transform_indices = @transform_2, window_bounds = array<i64: 2, 64>}, {pipeline_mode = #tpu.pipeline_mode<synchronous>, transform_indices = @transform_3, window_bounds = array<i64: 1, 64>}, {pipeline_mode = #tpu.pipeline_mode<synchronous>, transform_indices = @transform_4, window_bounds = array<i64: 1, 64>}, {transform_indices = @transform_5, window_bounds = array<i64: 16, 64>}]} {
    %c0 = arith.constant 0 : index
    %c0_0 = arith.constant 0 : index
    %0 = vector.load %arg3[%c0, %c0_0] : memref<2x64xf32, #tpu.memory_space<vmem>>, vector<1x64xf32>
    %cst = arith.constant 6.250000e-02 : f32
    %1 = vector.broadcast %cst : f32 to vector<1x64xf32>
    %2 = arith.mulf %0, %1 : vector<1x64xf32>
    %c1 = arith.constant 1 : index
    %c0_1 = arith.constant 0 : index
    %3 = vector.load %arg3[%c1, %c0_1] : memref<2x64xf32, #tpu.memory_space<vmem>>, vector<1x64xf32>
    %cst_2 = arith.constant 6.250000e-02 : f32
    %4 = vector.broadcast %cst_2 : f32 to vector<1x64xf32>
    %5 = arith.mulf %3, %4 : vector<1x64xf32>
    %6 = arith.mulf %2, %2 : vector<1x64xf32>
    %7 = arith.subf %5, %6 : vector<1x64xf32>
    %c0_3 = arith.constant 0 : index
    %c0_4 = arith.constant 0 : index
    %8 = vector.load %arg1[%c0_3, %c0_4] : memref<16x64xf32, #tpu.memory_space<vmem>>, vector<16x64xf32>
    %9 = vector.broadcast %2 : vector<1x64xf32> to vector<16x64xf32>
    %10 = arith.subf %8, %9 : vector<16x64xf32>
    %cst_5 = arith.constant 9.99999974E-6 : f32
    %11 = vector.broadcast %cst_5 : f32 to vector<1x64xf32>
    %12 = arith.addf %7, %11 : vector<1x64xf32>
    %13 = math.rsqrt %12 : vector<1x64xf32>
    %14 = vector.broadcast %13 : vector<1x64xf32> to vector<16x64xf32>
    %15 = arith.mulf %10, %14 : vector<16x64xf32>
    %c0_6 = arith.constant 0 : index
    %c0_7 = arith.constant 0 : index
    %16 = vector.load %arg4[%c0_6, %c0_7] : memref<1x64xf32, #tpu.memory_space<vmem>>, vector<1x64xf32>
    %17 = vector.broadcast %16 : vector<1x64xf32> to vector<16x64xf32>
    %18 = arith.mulf %15, %17 : vector<16x64xf32>
    %c0_8 = arith.constant 0 : index
    %c0_9 = arith.constant 0 : index
    %19 = vector.load %arg5[%c0_8, %c0_9] : memref<1x64xf32, #tpu.memory_space<vmem>>, vector<1x64xf32>
    %20 = vector.broadcast %19 : vector<1x64xf32> to vector<16x64xf32>
    %21 = arith.addf %18, %20 : vector<16x64xf32>
    %c0_10 = arith.constant 0 : index
    %c0_11 = arith.constant 0 : index
    %22 = vector.load %arg2[%c0_10, %c0_11] : memref<16x64xf32, #tpu.memory_space<vmem>>, vector<16x64xf32>
    %23 = arith.addf %21, %22 : vector<16x64xf32>
    %c0_12 = arith.constant 0 : index
    %c0_13 = arith.constant 0 : index
    %24 = vector.load %arg6[%c0_12, %c0_13] : memref<16x64xf32, #tpu.memory_space<vmem>>, vector<16x64xf32>
    tpu.vector_store %arg6[%c0_12, %c0_13], %23 {strides = array<i32>} : memref<16x64xf32, #tpu.memory_space<vmem>>, vector<16x64xf32>,
    return
  }
  func.func @transform_0(%arg0: i32) -> (i32, i32) {
    %c0_i32 = arith.constant 0 : i32
    %c0_i32_0 = arith.constant 0 : i32
    return %arg0, %c0_i32 : i32, i32
  }
  func.func @transform_1(%arg0: i32) -> (i32, i32) {
    %c0_i32 = arith.constant 0 : i32
    %c0_i32_0 = arith.constant 0 : i32
    return %arg0, %c0_i32 : i32, i32
  }
  func.func @transform_2(%arg0: i32) -> (i32, i32) {
    %c0_i32 = arith.constant 0 : i32
    %c0_i32_0 = arith.constant 0 : i32
    %c0_i32_1 = arith.constant 0 : i32
    return %c0_i32, %c0_i32_0 : i32, i32
  }
  func.func @transform_3(%arg0: i32) -> (i32, i32) {
    %c0_i32 = arith.constant 0 : i32
    %c0_i32_0 = arith.constant 0 : i32
    %c0_i32_1 = arith.constant 0 : i32
    return %c0_i32, %c0_i32_0 : i32, i32
  }
  func.func @transform_4(%arg0: i32) -> (i32, i32) {
    %c0_i32 = arith.constant 0 : i32
    %c0_i32_0 = arith.constant 0 : i32
    %c0_i32_1 = arith.constant 0 : i32
    return %c0_i32, %c0_i32_0 : i32, i32
  }
  func.func @transform_5(%arg0: i32) -> (i32, i32) {
    %c0_i32 = arith.constant 0 : i32
    %c0_i32_0 = arith.constant 0 : i32
    return %arg0, %c0_i32 : i32, i32
  }
}

module attributes {stable_mosaic.version = 11 : i64} {
  func.func @_message_kernel(%arg0: i32, %arg1: memref<32x64xbf16, #tpu.memory_space<vmem>>, %arg2: memref<32x64xbf16, #tpu.memory_space<vmem>>, %arg3: memref<32x16xbf16, #tpu.memory_space<vmem>>, %arg4: memref<64x128xbf16, #tpu.memory_space<vmem>>, %arg5: memref<64x128xbf16, #tpu.memory_space<vmem>>, %arg6: memref<16x128xbf16, #tpu.memory_space<vmem>>, %arg7: memref<1x128xf32, #tpu.memory_space<vmem>>, %arg8: memref<32x64xf32, #tpu.memory_space<vmem>>) attributes {dimension_semantics = [#tpu.dimension_semantics<parallel>], iteration_bounds = array<i64: 1>, scalar_prefetch = 0 : i64, scratch_operands = 0 : i64, tpu.core_type = #tpu.core_type<tc>, window_params = [{transform_indices = @transform_0, window_bounds = array<i64: 32, 64>}, {transform_indices = @transform_1, window_bounds = array<i64: 32, 64>}, {transform_indices = @transform_2, window_bounds = array<i64: 32, 16>}, {pipeline_mode = #tpu.pipeline_mode<synchronous>, transform_indices = @transform_3, window_bounds = array<i64: 64, 128>}, {pipeline_mode = #tpu.pipeline_mode<synchronous>, transform_indices = @transform_4, window_bounds = array<i64: 64, 128>}, {pipeline_mode = #tpu.pipeline_mode<synchronous>, transform_indices = @transform_5, window_bounds = array<i64: 16, 128>}, {pipeline_mode = #tpu.pipeline_mode<synchronous>, transform_indices = @transform_6, window_bounds = array<i64: 1, 128>}, {transform_indices = @transform_7, window_bounds = array<i64: 32, 64>}]} {
    %c0 = arith.constant 0 : index
    %c0_0 = arith.constant 0 : index
    %0 = vector.load %arg1[%c0, %c0_0] : memref<32x64xbf16, #tpu.memory_space<vmem>>, vector<32x64xbf16>
    %c0_1 = arith.constant 0 : index
    %c0_2 = arith.constant 0 : index
    %1 = vector.load %arg4[%c0_1, %c0_2] : memref<64x128xbf16, #tpu.memory_space<vmem>>, vector<64x128xbf16>
    %cst = arith.constant dense<0.000000e+00> : vector<32x128xf32>
    %2 = tpu.matmul %0, %1, %cst {dimension_numbers = #tpu.dot_dimension_numbers<[1], [0], [0], [1], [0, 0, 1, 1], [], []>} : vector<32x64xbf16>, vector<64x128xbf16>, vector<32x128xf32> -> vector<32x128xf32>
    %c0_3 = arith.constant 0 : index
    %c0_4 = arith.constant 0 : index
    %3 = vector.load %arg2[%c0_3, %c0_4] : memref<32x64xbf16, #tpu.memory_space<vmem>>, vector<32x64xbf16>
    %c0_5 = arith.constant 0 : index
    %c0_6 = arith.constant 0 : index
    %4 = vector.load %arg5[%c0_5, %c0_6] : memref<64x128xbf16, #tpu.memory_space<vmem>>, vector<64x128xbf16>
    %cst_7 = arith.constant dense<0.000000e+00> : vector<32x128xf32>
    %5 = tpu.matmul %3, %4, %cst_7 {dimension_numbers = #tpu.dot_dimension_numbers<[1], [0], [0], [1], [0, 0, 1, 1], [], []>} : vector<32x64xbf16>, vector<64x128xbf16>, vector<32x128xf32> -> vector<32x128xf32>
    %6 = arith.addf %2, %5 : vector<32x128xf32>
    %c0_8 = arith.constant 0 : index
    %c0_9 = arith.constant 0 : index
    %7 = vector.load %arg3[%c0_8, %c0_9] : memref<32x16xbf16, #tpu.memory_space<vmem>>, vector<32x16xbf16>
    %c0_10 = arith.constant 0 : index
    %c0_11 = arith.constant 0 : index
    %8 = vector.load %arg6[%c0_10, %c0_11] : memref<16x128xbf16, #tpu.memory_space<vmem>>, vector<16x128xbf16>
    %cst_12 = arith.constant dense<0.000000e+00> : vector<32x128xf32>
    %9 = tpu.matmul %7, %8, %cst_12 {dimension_numbers = #tpu.dot_dimension_numbers<[1], [0], [0], [1], [0, 0, 1, 1], [], []>} : vector<32x16xbf16>, vector<16x128xbf16>, vector<32x128xf32> -> vector<32x128xf32>
    %10 = arith.addf %6, %9 : vector<32x128xf32>
    %c0_13 = arith.constant 0 : index
    %c0_14 = arith.constant 0 : index
    %11 = vector.load %arg7[%c0_13, %c0_14] : memref<1x128xf32, #tpu.memory_space<vmem>>, vector<1x128xf32>
    %12 = vector.broadcast %11 : vector<1x128xf32> to vector<32x128xf32>
    %13 = arith.addf %10, %12 : vector<32x128xf32>
    %14 = vector.extract_strided_slice %13 {offsets = [0, 0], sizes = [32, 64], strides = [1, 1]} : vector<32x128xf32> to vector<32x64xf32>
    %cst_15 = arith.constant 0.000000e+00 : f32
    %15 = vector.broadcast %cst_15 : f32 to vector<32x64xf32>
    %16 = arith.subf %15, %14 : vector<32x64xf32>
    %17 = math.exp %16 : vector<32x64xf32>
    %cst_16 = arith.constant 1.000000e+00 : f32
    %18 = vector.broadcast %cst_16 : f32 to vector<32x64xf32>
    %19 = arith.addf %18, %17 : vector<32x64xf32>
    %20 = tpu.reciprocal %19 {approx = true} : vector<32x64xf32> -> vector<32x64xf32>
    %21 = vector.extract_strided_slice %13 {offsets = [0, 64], sizes = [32, 64], strides = [1, 1]} : vector<32x128xf32> to vector<32x64xf32>
    %cst_17 = arith.constant 0.000000e+00 : f32
    %22 = vector.broadcast %cst_17 : f32 to vector<32x64xf32>
    %23 = arith.maximumf %21, %22 : vector<32x64xf32>
    %24 = math.absf %21 : vector<32x64xf32>
    %cst_18 = arith.constant 0.000000e+00 : f32
    %25 = vector.broadcast %cst_18 : f32 to vector<32x64xf32>
    %26 = arith.subf %25, %24 : vector<32x64xf32>
    %27 = math.exp %26 : vector<32x64xf32>
    %cst_19 = arith.constant 1.000000e+00 : f32
    %28 = vector.broadcast %cst_19 : f32 to vector<32x64xf32>
    %29 = arith.addf %28, %27 : vector<32x64xf32>
    %30 = math.log %29 : vector<32x64xf32>
    %31 = arith.addf %23, %30 : vector<32x64xf32>
    %32 = arith.mulf %20, %31 : vector<32x64xf32>
    %c0_20 = arith.constant 0 : index
    %c0_21 = arith.constant 0 : index
    %33 = vector.load %arg8[%c0_20, %c0_21] : memref<32x64xf32, #tpu.memory_space<vmem>>, vector<32x64xf32>
    tpu.vector_store %arg8[%c0_20, %c0_21], %32 {strides = array<i32>} : memref<32x64xf32, #tpu.memory_space<vmem>>, vector<32x64xf32>,
    return
  }
  func.func @transform_0(%arg0: i32) -> (i32, i32) {
    %c0_i32 = arith.constant 0 : i32
    %c0_i32_0 = arith.constant 0 : i32
    return %arg0, %c0_i32 : i32, i32
  }
  func.func @transform_1(%arg0: i32) -> (i32, i32) {
    %c0_i32 = arith.constant 0 : i32
    %c0_i32_0 = arith.constant 0 : i32
    return %arg0, %c0_i32 : i32, i32
  }
  func.func @transform_2(%arg0: i32) -> (i32, i32) {
    %c0_i32 = arith.constant 0 : i32
    %c0_i32_0 = arith.constant 0 : i32
    return %arg0, %c0_i32 : i32, i32
  }
  func.func @transform_3(%arg0: i32) -> (i32, i32) {
    %c0_i32 = arith.constant 0 : i32
    %c0_i32_0 = arith.constant 0 : i32
    %c0_i32_1 = arith.constant 0 : i32
    return %c0_i32, %c0_i32_0 : i32, i32
  }
  func.func @transform_4(%arg0: i32) -> (i32, i32) {
    %c0_i32 = arith.constant 0 : i32
    %c0_i32_0 = arith.constant 0 : i32
    %c0_i32_1 = arith.constant 0 : i32
    return %c0_i32, %c0_i32_0 : i32, i32
  }
  func.func @transform_5(%arg0: i32) -> (i32, i32) {
    %c0_i32 = arith.constant 0 : i32
    %c0_i32_0 = arith.constant 0 : i32
    %c0_i32_1 = arith.constant 0 : i32
    return %c0_i32, %c0_i32_0 : i32, i32
  }
  func.func @transform_6(%arg0: i32) -> (i32, i32) {
    %c0_i32 = arith.constant 0 : i32
    %c0_i32_0 = arith.constant 0 : i32
    %c0_i32_1 = arith.constant 0 : i32
    return %c0_i32, %c0_i32_0 : i32, i32
  }
  func.func @transform_7(%arg0: i32) -> (i32, i32) {
    %c0_i32 = arith.constant 0 : i32
    %c0_i32_0 = arith.constant 0 : i32
    return %arg0, %c0_i32 : i32, i32
  }
}

module attributes {stable_mosaic.version = 11 : i64} {
  func.func @_head_kernel(%arg0: memref<2x64xf32, #tpu.memory_space<vmem>>, %arg1: memref<64x128xbf16, #tpu.memory_space<vmem>>, %arg2: memref<1x128xf32, #tpu.memory_space<vmem>>, %arg3: memref<1x128xf32, #tpu.memory_space<vmem>>, %arg4: memref<1x1xf32, #tpu.memory_space<vmem>>, %arg5: memref<2x1xf32, #tpu.memory_space<vmem>>) attributes {dimension_semantics = [], scalar_prefetch = 0 : i64, scratch_operands = 0 : i64, tpu.core_type = #tpu.core_type<tc>} {
    %c0 = arith.constant 0 : index
    %c0_0 = arith.constant 0 : index
    %0 = vector.load %arg0[%c0, %c0_0] : memref<2x64xf32, #tpu.memory_space<vmem>>, vector<2x64xf32>
    %cst = arith.constant 0.000000e+00 : f32
    %1 = vector.broadcast %cst : f32 to vector<2x64xf32>
    %2 = arith.maximumf %0, %1 : vector<2x64xf32>
    %3 = math.absf %0 : vector<2x64xf32>
    %cst_1 = arith.constant 0.000000e+00 : f32
    %4 = vector.broadcast %cst_1 : f32 to vector<2x64xf32>
    %5 = arith.subf %4, %3 : vector<2x64xf32>
    %6 = math.exp %5 : vector<2x64xf32>
    %cst_2 = arith.constant 1.000000e+00 : f32
    %7 = vector.broadcast %cst_2 : f32 to vector<2x64xf32>
    %8 = arith.addf %7, %6 : vector<2x64xf32>
    %9 = math.log %8 : vector<2x64xf32>
    %10 = arith.addf %2, %9 : vector<2x64xf32>
    %11 = arith.truncf %10 : vector<2x64xf32> to vector<2x64xbf16>
    %c0_3 = arith.constant 0 : index
    %c0_4 = arith.constant 0 : index
    %12 = vector.load %arg1[%c0_3, %c0_4] : memref<64x128xbf16, #tpu.memory_space<vmem>>, vector<64x128xbf16>
    %cst_5 = arith.constant dense<0.000000e+00> : vector<2x128xf32>
    %13 = tpu.matmul %11, %12, %cst_5 {dimension_numbers = #tpu.dot_dimension_numbers<[1], [0], [0], [1], [0, 0, 1, 1], [], []>} : vector<2x64xbf16>, vector<64x128xbf16>, vector<2x128xf32> -> vector<2x128xf32>
    %c0_6 = arith.constant 0 : index
    %c0_7 = arith.constant 0 : index
    %14 = vector.load %arg2[%c0_6, %c0_7] : memref<1x128xf32, #tpu.memory_space<vmem>>, vector<1x128xf32>
    %15 = vector.broadcast %14 : vector<1x128xf32> to vector<2x128xf32>
    %16 = arith.addf %13, %15 : vector<2x128xf32>
    %cst_8 = arith.constant 0.000000e+00 : f32
    %17 = vector.broadcast %cst_8 : f32 to vector<2x128xf32>
    %18 = arith.maximumf %16, %17 : vector<2x128xf32>
    %19 = math.absf %16 : vector<2x128xf32>
    %cst_9 = arith.constant 0.000000e+00 : f32
    %20 = vector.broadcast %cst_9 : f32 to vector<2x128xf32>
    %21 = arith.subf %20, %19 : vector<2x128xf32>
    %22 = math.exp %21 : vector<2x128xf32>
    %cst_10 = arith.constant 1.000000e+00 : f32
    %23 = vector.broadcast %cst_10 : f32 to vector<2x128xf32>
    %24 = arith.addf %23, %22 : vector<2x128xf32>
    %25 = math.log %24 : vector<2x128xf32>
    %26 = arith.addf %18, %25 : vector<2x128xf32>
    %c0_11 = arith.constant 0 : index
    %c0_12 = arith.constant 0 : index
    %27 = vector.load %arg3[%c0_11, %c0_12] : memref<1x128xf32, #tpu.memory_space<vmem>>, vector<1x128xf32>
    %28 = vector.broadcast %27 : vector<1x128xf32> to vector<2x128xf32>
    %29 = arith.mulf %26, %28 : vector<2x128xf32>
    %cst_13 = arith.constant dense<0.000000e+00> : vector<2xf32>
    %30 = vector.multi_reduction <add>, %29, %cst_13 [1] : vector<2x128xf32> to vector<2xf32>
    %31 = vector.shape_cast %30 : vector<2xf32> to vector<2x1xf32>
    %c0_14 = arith.constant 0 : index
    %c0_15 = arith.constant 0 : index
    %32 = vector.load %arg4[%c0_14, %c0_15] : memref<1x1xf32, #tpu.memory_space<vmem>>, vector<1x1xf32>
    %33 = vector.broadcast %32 : vector<1x1xf32> to vector<2x1xf32>
    %34 = arith.addf %31, %33 : vector<2x1xf32>
    %c0_16 = arith.constant 0 : index
    %c0_17 = arith.constant 0 : index
    %35 = vector.load %arg5[%c0_16, %c0_17] : memref<2x1xf32, #tpu.memory_space<vmem>>, vector<2x1xf32>
    tpu.vector_store %arg5[%c0_16, %c0_17], %34 {strides = array<i32>} : memref<2x1xf32, #tpu.memory_space<vmem>>, vector<2x1xf32>,
    return
  }
}

</mosaic_0001>

<llo_original>
// kernel: cgcnn_forward.11
$region0: #{cgcnn_forward.11}
  #allocation0 [shape = 'u32[]', space=smem, size = 0x4, offset = 0x4, fixed_abs, tag = 'smem constant byte address 0x4 - core index']
  #allocation1 [shape = 'u32[144,128]{1,0:T(1,128)}', space=vmem, size = 0x12000, scoped, tag = 'internal scratch']
  %s0 = inlined_call_operand.vmem [shape: bf16[16,16], index: 0, kind: input, shape index: {}]
  %s1 = inlined_call_operand.vmem [shape: bf16[16,64], index: 1, kind: input, shape index: {}]
  %s2 = inlined_call_operand.vmem [shape: f32[1,64], index: 2, kind: input, shape index: {}]
  %s3 = inlined_call_operand.vmem [shape: f32[16,64], index: 3, kind: output, shape index: {}]
  %s4 = sld [smem:[#allocation0]]
  $region22: #{cgcnn_forward.11} parent=0
    _
  %s6 = ssub.s32 1, %s4
  %s7 = scalar_select 0, %s6, %s4
  // Predicated region
  $region2: #{cgcnn_forward.11} parent=0 // pred_check
    _
  $region3: #{cgcnn_forward.11} parent=0 // pred_check_branch
    %9 = sbr.rel (0) target = $region5
  $region4: #{cgcnn_forward.11} parent=0 // pred_region
    _
  $region5: #{cgcnn_forward.11} parent=0 // pred_fallthru
    _
  // Predicated region
  $region6: #{cgcnn_forward.11} parent=0 // pred_check
    _
  $region7: #{cgcnn_forward.11} parent=0 // pred_check_branch
    %11 = sbr.rel (0) target = $region9
  $region8: #{cgcnn_forward.11} parent=0 // pred_region
    _
  $region9: #{cgcnn_forward.11} parent=0 // pred_fallthru
    _
  // Predicated region
  $region10: #{cgcnn_forward.11} parent=0 // pred_check
    _
  $region11: #{cgcnn_forward.11} parent=0 // pred_check_branch
    %13 = sbr.rel (0) target = $region13
  $region12: #{cgcnn_forward.11} parent=0 // pred_region
    _
  $region13: #{cgcnn_forward.11} parent=0 // pred_fallthru
    _
  %v15 = vld [vmem:[%s0] sm:$0xf]
  %v16 = vld [vmem:[%s0 + $0x4] sm:$0xf]
  %v17 = vld [vmem:[%s1] sm:$0xf]
  %v18 = vld [vmem:[%s1 + $0x4] sm:$0xf]
  %v19 = vld [vmem:[%s2] sm:$0x1]
  %v21 = vlaneseq
  %v22 = vshrl.u32 %v21, 7
  %v23 = vsub.s32 0, %v22
  %v24 = vrot.slane %v19, %v23
  %v28 = vunpack.c.l.b16 %v15
  %v29 = vunpack.c.l.b16 %v16
  %v30 = vpack.c.b16 %v29, %v28
  %v33 = vunpack.c.l.b16 %v17
  %v34 = vunpack.c.l.b16 %v18
  %v35 = vpack.c.b16 %v34, %v33
  %vm37 = vcmask 130048
  %v39 = vsel %vm37, %v30, 0
  %41 = vmatprep.subr.bf16.mxu0 0
  %42 = vmatpush1.bf16.msra.mxu0 0
  %43 = vmatprep.subr.bf16.mxu0 0
  %44 = vmatpush1.bf16.msra.mxu0 0
  %45 = vmatprep.subr.bf16.mxu0 0
  %46 = vmatpush1.bf16.msra.mxu0 0
  %47 = vmatprep.subr.bf16.mxu0 0
  %48 = vmatpush1.bf16.msra.mxu0 0
  %49 = vmatprep.subr.bf16.mxu0 0
  %50 = vmatpush1.bf16.msra.mxu0 0
  %51 = vmatprep.subr.bf16.mxu0 0
  %52 = vmatpush1.bf16.msra.mxu0 0
  %53 = vmatprep.subr.bf16.mxu0 0
  %54 = vmatpush1.bf16.msra.mxu0 0
  %55 = vmatprep.subr.bf16.mxu0 0
  %56 = vmatpush1.bf16.msra.mxu0 %v35
  %57 = vmatprep.subr.bf16.mxu0 0
  %58 = vmatpush2.bf16.msra.mxu0 0
  %59 = vmatprep.subr.bf16.mxu0 0
  %60 = vmatpush2.bf16.msra.mxu0 0
  %61 = vmatprep.subr.bf16.mxu0 0
  %62 = vmatpush2.bf16.msra.mxu0 0
  %63 = vmatprep.subr.bf16.mxu0 0
  %64 = vmatpush2.bf16.msra.mxu0 0
  %65 = vmatprep.subr.bf16.mxu0 0
  %66 = vmatpush2.bf16.msra.mxu0 0
  %67 = vmatprep.subr.bf16.mxu0 0
  %68 = vmatpush2.bf16.msra.mxu0 0
  %69 = vmatprep.subr.bf16.mxu0 0
  %70 = vmatpush2.bf16.msra.mxu0 0
  %71 = vmatprep.subr.bf16.mxu0 0
  %72 = vmatpush2.bf16.msra.mxu0 0
  %73 = vmatprep.mubr.bf16.mxu0 0
  %74 = vmatmul.mubr.bf16.gmra.mxu0 %v39
  %v75 = vpop.f32.mrf.mxu0
  %v76 = vadd.f32 %v24, %v75
  %v77 = vpop.f32.mrf.mxu0
  %v78 = vpop.f32.mrf.mxu0
  %v79 = vadd.f32 %v24, %v78
  %v80 = vpop.f32.mrf.mxu0
  %81 = vdwg.mxu0
  %vm82 = vcmask 523264
  %83 = vst.msk [vmem:[%s3] sm:$0xff] %vm82, %v76
  %84 = vst.msk [vmem:[%s3 + $0x8] sm:$0xff] %vm82, %v79
  // Predicated region
  $region14: #{cgcnn_forward.11} parent=0 // pred_check
    _
  $region15: #{cgcnn_forward.11} parent=0 // pred_check_branch
    %86 = sbr.rel (0) target = $region17
  $region16: #{cgcnn_forward.11} parent=0 // pred_region
    _
  $region17: #{cgcnn_forward.11} parent=0 // pred_fallthru
    _
  // Predicated region
  $region18: #{cgcnn_forward.11} parent=0 // pred_check
    _
  $region19: #{cgcnn_forward.11} parent=0 // pred_check_branch
    %88 = sbr.rel (0) target = $region21
  $region20: #{cgcnn_forward.11} parent=0 // pred_region
    _
  $region21: #{cgcnn_forward.11} parent=0 // pred_fallthru
    _

// kernel: cgcnn_forward.13
$region0: #{cgcnn_forward.13}
  #allocation0 [shape = 'u32[]', space=smem, size = 0x4, offset = 0x4, fixed_abs, tag = 'smem constant byte address 0x4 - core index']
  #allocation1 [shape = 'u32[144,128]{1,0:T(1,128)}', space=vmem, size = 0x12000, scoped, tag = 'internal scratch']
  %s0 = inlined_call_operand.vmem [shape: f32[16,64], index: 0, kind: input, shape index: {}]
  %s1 = inlined_call_operand.vmem [shape: f32[2,64], index: 1, kind: output, shape index: {}]
  %s2 = sld [smem:[#allocation0]]
  $region18: #{cgcnn_forward.13} parent=0
    _
  %s4 = ssub.s32 1, %s2
  %s5 = scalar_select 0, %s4, %s2
  // Predicated region
  $region2: #{cgcnn_forward.13} parent=0 // pred_check
    _
  $region3: #{cgcnn_forward.13} parent=0 // pred_check_branch
    %7 = sbr.rel (0) target = $region5
  $region4: #{cgcnn_forward.13} parent=0 // pred_region
    _
  $region5: #{cgcnn_forward.13} parent=0 // pred_fallthru
    _
  %p8 = scmp.eq.s32.totalorder 0, 0
  // Predicated region
  $region6: #{cgcnn_forward.13} parent=0 // pred_check
    %p9 = pneg %p8
  $region7: #{cgcnn_forward.13} parent=0 // pred_check_branch
    %11 = sbr.rel (%p9) target = $region9
  $region8: #{cgcnn_forward.13} parent=0 // pred_region
    %vm12 = vcmask 517120
    %13 = vst.msk [vmem:[%s1] sm:$0x3] %vm12, 0.0
  $region9: #{cgcnn_forward.13} parent=0 // pred_fallthru
    _
  %v14 = vld [vmem:[%s0] sm:$0xff]
  %v15 = vld [vmem:[%s0 + $0x8] sm:$0xff]
  %v16 = vld [vmem:[%s1] sm:$0x1]
  %vm17 = vcmask 523264
  %v18 = vsel %vm17, %v14, 0.0
  %v19 = vsel %vm17, %v15, 0.0
  %v20 = vadd.f32 %v18, %v19
  %v21 = vrot.slane %v20, 4
  %v22 = vadd.f32 %v20, %v21
  %v23 = vrot.slane %v22, 2
  %v24 = vadd.f32 %v22, %v23
  %v25 = vrot.slane %v24, 1
  %v26 = vadd.f32 %v24, %v25
  %v27 = vadd.f32 %v16, %v26
  %vm28 = vcmask 516096
  %29 = vst.msk [vmem:[%s1] sm:$0x1] %vm28, %v27
  %v30 = vld [vmem:[%s1 + $0x1] sm:$0x1]
  %v31 = vmul.f32 %v14, %v14
  %v32 = vmul.f32 %v15, %v15
  %v33 = vsel %vm17, %v31, 0.0
  %v34 = vsel %vm17, %v32, 0.0
  %v35 = vadd.f32 %v33, %v34
  %v36 = vrot.slane %v35, 4
  %v37 = vadd.f32 %v35, %v36
  %v38 = vrot.slane %v37, 2
  %v39 = vadd.f32 %v37, %v38
  %v40 = vrot.slane %v39, 1
  %v41 = vadd.f32 %v39, %v40
  %v42 = vadd.f32 %v30, %v41
  %43 = vst.msk [vmem:[%s1 + $0x1] sm:$0x1] %vm28, %v42
  // Predicated region
  $region10: #{cgcnn_forward.13} parent=0 // pred_check
    _
  $region11: #{cgcnn_forward.13} parent=0 // pred_check_branch
    %45 = sbr.rel (0) target = $region13
  $region12: #{cgcnn_forward.13} parent=0 // pred_region
    _
  $region13: #{cgcnn_forward.13} parent=0 // pred_fallthru
    _
  // Predicated region
  $region14: #{cgcnn_forward.13} parent=0 // pred_check
    _
  $region15: #{cgcnn_forward.13} parent=0 // pred_check_branch
    %47 = sbr.rel (0) target = $region17
  $region16: #{cgcnn_forward.13} parent=0 // pred_region
    _
  $region17: #{cgcnn_forward.13} parent=0 // pred_fallthru
    _

// kernel: cgcnn_forward.14
$region0: #{cgcnn_forward.14}
  #allocation0 [shape = 'u32[]', space=smem, size = 0x4, offset = 0x4, fixed_abs, tag = 'smem constant byte address 0x4 - core index']
  #allocation1 [shape = 'u32[144,128]{1,0:T(1,128)}', space=vmem, size = 0x12000, scoped, tag = 'internal scratch']
  %s0 = inlined_call_operand.vmem [shape: f32[16,64], index: 0, kind: input, shape index: {}]
  %s1 = inlined_call_operand.vmem [shape: f32[16,64], index: 1, kind: input, shape index: {}, may-alias: {1,5}]
  %s2 = inlined_call_operand.vmem [shape: f32[2,64], index: 2, kind: input, shape index: {}]
  %s3 = inlined_call_operand.vmem [shape: f32[1,64], index: 3, kind: input, shape index: {}]
  %s4 = inlined_call_operand.vmem [shape: f32[1,64], index: 4, kind: input, shape index: {}]
  %s5 = inlined_call_operand.vmem [shape: f32[16,64], index: 5, kind: output, shape index: {}, may-alias: {1,5}]
  %s6 = sld [smem:[#allocation0]]
  $region30: #{cgcnn_forward.14} parent=0
    _
  %s8 = ssub.s32 1, %s6
  %s9 = scalar_select 0, %s8, %s6
  // Predicated region
  $region2: #{cgcnn_forward.14} parent=0 // pred_check
    _
  $region3: #{cgcnn_forward.14} parent=0 // pred_check_branch
    %11 = sbr.rel (0) target = $region5
  $region4: #{cgcnn_forward.14} parent=0 // pred_region
    _
  $region5: #{cgcnn_forward.14} parent=0 // pred_fallthru
    _
  // Predicated region
  $region6: #{cgcnn_forward.14} parent=0 // pred_check
    _
  $region7: #{cgcnn_forward.14} parent=0 // pred_check_branch
    %13 = sbr.rel (0) target = $region9
  $region8: #{cgcnn_forward.14} parent=0 // pred_region
    _
  $region9: #{cgcnn_forward.14} parent=0 // pred_fallthru
    _
  // Predicated region
  $region10: #{cgcnn_forward.14} parent=0 // pred_check
    _
  $region11: #{cgcnn_forward.14} parent=0 // pred_check_branch
    %15 = sbr.rel (0) target = $region13
  $region12: #{cgcnn_forward.14} parent=0 // pred_region
    _
  $region13: #{cgcnn_forward.14} parent=0 // pred_fallthru
    _
  // Predicated region
  $region14: #{cgcnn_forward.14} parent=0 // pred_check
    _
  $region15: #{cgcnn_forward.14} parent=0 // pred_check_branch
    %17 = sbr.rel (0) target = $region17
  $region16: #{cgcnn_forward.14} parent=0 // pred_region
    _
  $region17: #{cgcnn_forward.14} parent=0 // pred_fallthru
    _
  // Predicated region
  $region18: #{cgcnn_forward.14} parent=0 // pred_check
    _
  $region19: #{cgcnn_forward.14} parent=0 // pred_check_branch
    %19 = sbr.rel (0) target = $region21
  $region20: #{cgcnn_forward.14} parent=0 // pred_region
    _
  $region21: #{cgcnn_forward.14} parent=0 // pred_fallthru
    _
  %v20 = vld [vmem:[%s2] sm:$0x1]
  %v21 = vmul.f32 %v20, 0.0625
  %v22 = vld [vmem:[%s2 + $0x1] sm:$0x1]
  %v23 = vmul.f32 %v22, 0.0625
  %v24 = vmul.f32 %v21, %v21
  %v25 = vsub.f32 %v23, %v24
  %v26 = vld [vmem:[%s0] sm:$0xff]
  %v27 = vld [vmem:[%s0 + $0x8] sm:$0xff]
  %v28 = vlaneseq
  %v29 = vshrl.u32 %v28, 7
  %v30 = vsub.s32 0, %v29
  %v31 = vrot.slane %v21, %v30
  %v32 = vsub.f32 %v26, %v31
  %v33 = vsub.f32 %v27, %v31
  %v34 = vadd.f32 %v25, 1e-05
  %v35 = vrsqrt.pop %v34
  %v36 = vlaneseq
  %v37 = vshrl.u32 %v36, 7
  %v38 = vsub.s32 0, %v37
  %v39 = vrot.slane %v35, %v38
  %v40 = vmul.f32 %v32, %v39
  %v41 = vmul.f32 %v33, %v39
  %v42 = vld [vmem:[%s3] sm:$0x1]
  %v44 = vlaneseq
  %v45 = vshrl.u32 %v44, 7
  %v46 = vsub.s32 0, %v45
  %v47 = vrot.slane %v42, %v46
  %v49 = vmul.f32 %v40, %v47
  %v50 = vmul.f32 %v41, %v47
  %v51 = vld [vmem:[%s4] sm:$0x1]
  %v53 = vlaneseq
  %v54 = vshrl.u32 %v53, 7
  %v55 = vsub.s32 0, %v54
  %v56 = vrot.slane %v51, %v55
  %v58 = vadd.f32 %v49, %v56
  %v59 = vadd.f32 %v50, %v56
  %v60 = vld [vmem:[%s1] sm:$0xff]
  %v61 = vld [vmem:[%s1 + $0x8] sm:$0xff]
  %v62 = vadd.f32 %v58, %v60
  %v63 = vadd.f32 %v59, %v61
  %vm64 = vcmask 523264
  %65 = vst.msk [vmem:[%s5] sm:$0xff] %vm64, %v62
  %66 = vst.msk [vmem:[%s5 + $0x8] sm:$0xff] %vm64, %v63
  // Predicated region
  $region22: #{cgcnn_forward.14} parent=0 // pred_check
    _
  $region23: #{cgcnn_forward.14} parent=0 // pred_check_branch
    %68 = sbr.rel (0) target = $region25
  $region24: #{cgcnn_forward.14} parent=0 // pred_region
    _
  $region25: #{cgcnn_forward.14} parent=0 // pred_fallthru
    _
  // Predicated region
  $region26: #{cgcnn_forward.14} parent=0 // pred_check
    _
  $region27: #{cgcnn_forward.14} parent=0 // pred_check_branch
    %70 = sbr.rel (0) target = $region29
  $region28: #{cgcnn_forward.14} parent=0 // pred_region
    _
  $region29: #{cgcnn_forward.14} parent=0 // pred_fallthru
    _

// kernel: cgcnn_forward.12
$region0: #{cgcnn_forward.12}
  #allocation0 [shape = 'u32[]', space=smem, size = 0x4, offset = 0x4, fixed_abs, tag = 'smem constant byte address 0x4 - core index']
  #allocation1 [shape = 'u32[144,128]{1,0:T(1,128)}', space=vmem, size = 0x12000, scoped, tag = 'internal scratch']
  %s0 = inlined_call_operand.vmem [shape: bf16[32,64], index: 0, kind: input, shape index: {}]
  %s1 = inlined_call_operand.vmem [shape: bf16[32,64], index: 1, kind: input, shape index: {}]
  %s2 = inlined_call_operand.vmem [shape: bf16[32,16], index: 2, kind: input, shape index: {}]
  %s3 = inlined_call_operand.vmem [shape: bf16[64,128], index: 3, kind: input, shape index: {}]
  %s4 = inlined_call_operand.vmem [shape: bf16[64,128], index: 4, kind: input, shape index: {}]
  %s5 = inlined_call_operand.vmem [shape: bf16[16,128], index: 5, kind: input, shape index: {}]
  %s6 = inlined_call_operand.vmem [shape: f32[1,128], index: 6, kind: input, shape index: {}]
  %s7 = inlined_call_operand.vmem [shape: f32[32,64], index: 7, kind: output, shape index: {}]
  %s8 = sld [smem:[#allocation0]]
  $region38: #{cgcnn_forward.12} parent=0
    _
  %s10 = ssub.s32 1, %s8
  %s11 = scalar_select 0, %s10, %s8
  // Predicated region
  $region2: #{cgcnn_forward.12} parent=0 // pred_check
    _
  $region3: #{cgcnn_forward.12} parent=0 // pred_check_branch
    %13 = sbr.rel (0) target = $region5
  $region4: #{cgcnn_forward.12} parent=0 // pred_region
    _
  $region5: #{cgcnn_forward.12} parent=0 // pred_fallthru
    _
  // Predicated region
  $region6: #{cgcnn_forward.12} parent=0 // pred_check
    _
  $region7: #{cgcnn_forward.12} parent=0 // pred_check_branch
    %15 = sbr.rel (0) target = $region9
  $region8: #{cgcnn_forward.12} parent=0 // pred_region
    _
  $region9: #{cgcnn_forward.12} parent=0 // pred_fallthru
    _
  // Predicated region
  $region10: #{cgcnn_forward.12} parent=0 // pred_check
    _
  $region11: #{cgcnn_forward.12} parent=0 // pred_check_branch
    %17 = sbr.rel (0) target = $region13
  $region12: #{cgcnn_forward.12} parent=0 // pred_region
    _
  $region13: #{cgcnn_forward.12} parent=0 // pred_fallthru
    _
  // Predicated region
  $region14: #{cgcnn_forward.12} parent=0 // pred_check
    _
  $region15: #{cgcnn_forward.12} parent=0 // pred_check_branch
    %19 = sbr.rel (0) target = $region17
  $region16: #{cgcnn_forward.12} parent=0 // pred_region
    _
  $region17: #{cgcnn_forward.12} parent=0 // pred_fallthru
    _
  // Predicated region
  $region18: #{cgcnn_forward.12} parent=0 // pred_check
    _
  $region19: #{cgcnn_forward.12} parent=0 // pred_check_branch
    %21 = sbr.rel (0) target = $region21
  $region20: #{cgcnn_forward.12} parent=0 // pred_region
    _
  $region21: #{cgcnn_forward.12} parent=0 // pred_fallthru
    _
  // Predicated region
  $region22: #{cgcnn_forward.12} parent=0 // pred_check
    _
  $region23: #{cgcnn_forward.12} parent=0 // pred_check_branch
    %23 = sbr.rel (0) target = $region25
  $region24: #{cgcnn_forward.12} parent=0 // pred_region
    _
  $region25: #{cgcnn_forward.12} parent=0 // pred_fallthru
    _
  // Predicated region
  $region26: #{cgcnn_forward.12} parent=0 // pred_check
    _
  $region27: #{cgcnn_forward.12} parent=0 // pred_check_branch
    %25 = sbr.rel (0) target = $region29
  $region28: #{cgcnn_forward.12} parent=0 // pred_region
    _
  $region29: #{cgcnn_forward.12} parent=0 // pred_fallthru
    _
  %v27 = vld [vmem:[%s0] sm:$0xf]
  %v28 = vld [vmem:[%s0 + $0x4] sm:$0xf]
  %v29 = vld [vmem:[%s0 + $0x8] sm:$0xf]
  %v30 = vld [vmem:[%s0 + $0xc] sm:$0xf]
  %v31 = vld [vmem:[%s3] sm:$0xf]
  %v32 = vld [vmem:[%s3 + $0x4] sm:$0xf]
  %v33 = vld [vmem:[%s3 + $0x8] sm:$0xf]
  %v34 = vld [vmem:[%s3 + $0xc] sm:$0xf]
  %v35 = vld [vmem:[%s3 + $0x10] sm:$0xf]
  %v36 = vld [vmem:[%s3 + $0x14] sm:$0xf]
  %v37 = vld [vmem:[%s3 + $0x18] sm:$0xf]
  %v38 = vld [vmem:[%s3 + $0x1c] sm:$0xf]
  %v39 = vld [vmem:[%s1] sm:$0xf]
  %v40 = vld [vmem:[%s1 + $0x4] sm:$0xf]
  %v41 = vld [vmem:[%s1 + $0x8] sm:$0xf]
  %v42 = vld [vmem:[%s1 + $0xc] sm:$0xf]
  %v43 = vld [vmem:[%s4] sm:$0xf]
  %v44 = vld [vmem:[%s4 + $0x4] sm:$0xf]
  %v45 = vld [vmem:[%s4 + $0x8] sm:$0xf]
  %v46 = vld [vmem:[%s4 + $0xc] sm:$0xf]
  %v47 = vld [vmem:[%s4 + $0x10] sm:$0xf]
  %v48 = vld [vmem:[%s4 + $0x14] sm:$0xf]
  %v49 = vld [vmem:[%s4 + $0x18] sm:$0xf]
  %v50 = vld [vmem:[%s4 + $0x1c] sm:$0xf]
  %v55 = vunpack.c.l.b16 %v39
  %v56 = vunpack.c.l.b16 %v40
  %v57 = vunpack.c.l.b16 %v41
  %v58 = vunpack.c.l.b16 %v42
  %v59 = vpack.c.b16 %v56, %v55
  %v60 = vpack.c.b16 %v58, %v57
  %v69 = vunpack.c.l.b16 %v43
  %v70 = vunpack.c.l.b16 %v44
  %v71 = vunpack.c.l.b16 %v45
  %v72 = vunpack.c.l.b16 %v46
  %v73 = vunpack.c.l.b16 %v47
  %v74 = vunpack.c.l.b16 %v48
  %v75 = vunpack.c.l.b16 %v49
  %v76 = vunpack.c.l.b16 %v50
  %v77 = vpack.c.b16 %v70, %v69
  %v78 = vpack.c.b16 %v72, %v71
  %v79 = vpack.c.b16 %v74, %v73
  %v80 = vpack.c.b16 %v76, %v75
  %vm85 = vcmask 523264
  %v87 = vsel %vm85, %v59, 0
  %v90 = vsel %vm85, %v60, 0
  %92 = vmatprep.subr.bf16.mxu0 0
  %93 = vmatpush1.bf16.msra.mxu0 0
  %94 = vmatprep.subr.bf16.mxu0 0
  %95 = vmatpush1.bf16.msra.mxu0 0
  %96 = vmatprep.subr.bf16.mxu0 0
  %97 = vmatpush1.bf16.msra.mxu0 0
  %98 = vmatprep.subr.bf16.mxu0 0
  %99 = vmatpush1.bf16.msra.mxu0 0
  %100 = vmatprep.subr.bf16.mxu0 0
  %101 = vmatpush1.bf16.msra.mxu0 %v80
  %102 = vmatprep.subr.bf16.mxu0 0
  %103 = vmatpush1.bf16.msra.mxu0 %v79
  %104 = vmatprep.subr.bf16.mxu0 0
  %105 = vmatpush1.bf16.msra.mxu0 %v78
  %106 = vmatprep.subr.bf16.mxu0 0
  %107 = vmatpush1.bf16.msra.mxu0 %v77
  %108 = vmatprep.subr.bf16.mxu0 0
  %109 = vmatpush2.bf16.msra.mxu0 0
  %110 = vmatprep.subr.bf16.mxu0 0
  %111 = vmatpush2.bf16.msra.mxu0 0
  %112 = vmatprep.subr.bf16.mxu0 0
  %113 = vmatpush2.bf16.msra.mxu0 0
  %114 = vmatprep.subr.bf16.mxu0 0
  %115 = vmatpush2.bf16.msra.mxu0 0
  %116 = vmatprep.subr.bf16.mxu0 0
  %117 = vmatpush2.bf16.msra.mxu0 0
  %118 = vmatprep.subr.bf16.mxu0 0
  %119 = vmatpush2.bf16.msra.mxu0 0
  %120 = vmatprep.subr.bf16.mxu0 0
  %121 = vmatpush2.bf16.msra.mxu0 0
  %122 = vmatprep.subr.bf16.mxu0 0
  %123 = vmatpush2.bf16.msra.mxu0 0
  %124 = vmatprep.mubr.bf16.mxu0 0
  %125 = vmatmul.mubr.bf16.gmra.mxu0 %v87
  %v126 = vpop.f32.mrf.mxu0
  %v127 = vadd.f32 0.0, %v126
  %v128 = vpop.f32.mrf.mxu0
  %v129 = vpop.f32.mrf.mxu0
  %v130 = vadd.f32 0.0, %v129
  %v131 = vpop.f32.mrf.mxu0
  %132 = vmatprep.mubr.bf16.mxu0 0
  %133 = vmatmul.mubr.bf16.gmra.mxu0 %v90
  %v134 = vpop.f32.mrf.mxu0
  %v135 = vadd.f32 0.0, %v134
  %v136 = vpop.f32.mrf.mxu0
  %v137 = vpop.f32.mrf.mxu0
  %v138 = vadd.f32 0.0, %v137
  %v139 = vpop.f32.mrf.mxu0
  %140 = vdwg.mxu0
  %v145 = vunpack.c.l.b16 %v27
  %v146 = vunpack.c.l.b16 %v28
  %v147 = vunpack.c.l.b16 %v29
  %v148 = vunpack.c.l.b16 %v30
  %v149 = vpack.c.b16 %v146, %v145
  %v150 = vpack.c.b16 %v148, %v147
  %v159 = vunpack.c.l.b16 %v31
  %v160 = vunpack.c.l.b16 %v32
  %v161 = vunpack.c.l.b16 %v33
  %v162 = vunpack.c.l.b16 %v34
  %v163 = vunpack.c.l.b16 %v35
  %v164 = vunpack.c.l.b16 %v36
  %v165 = vunpack.c.l.b16 %v37
  %v166 = vunpack.c.l.b16 %v38
  %v167 = vpack.c.b16 %v160, %v159
  %v168 = vpack.c.b16 %v162, %v161
  %v169 = vpack.c.b16 %v164, %v163
  %v170 = vpack.c.b16 %v166, %v165
  %v176 = vsel %vm85, %v149, 0
  %v179 = vsel %vm85, %v150, 0
  %181 = vmatprep.subr.bf16.mxu0 0
  %182 = vmatpush1.bf16.msra.mxu0 0
  %183 = vmatprep.subr.bf16.mxu0 0
  %184 = vmatpush1.bf16.msra.mxu0 0
  %185 = vmatprep.subr.bf16.mxu0 0
  %186 = vmatpush1.bf16.msra.mxu0 0
  %187 = vmatprep.subr.bf16.mxu0 0
  %188 = vmatpush1.bf16.msra.mxu0 0
  %189 = vmatprep.subr.bf16.mxu0 0
  %190 = vmatpush1.bf16.msra.mxu0 %v170
  %191 = vmatprep.subr.bf16.mxu0 0
  %192 = vmatpush1.bf16.msra.mxu0 %v169
  %193 = vmatprep.subr.bf16.mxu0 0
  %194 = vmatpush1.bf16.msra.mxu0 %v168
  %195 = vmatprep.subr.bf16.mxu0 0
  %196 = vmatpush1.bf16.msra.mxu0 %v167
  %197 = vmatprep.subr.bf16.mxu0 0
  %198 = vmatpush2.bf16.msra.mxu0 0
  %199 = vmatprep.subr.bf16.mxu0 0
  %200 = vmatpush2.bf16.msra.mxu0 0
  %201 = vmatprep.subr.bf16.mxu0 0
  %202 = vmatpush2.bf16.msra.mxu0 0
  %203 = vmatprep.subr.bf16.mxu0 0
  %204 = vmatpush2.bf16.msra.mxu0 0
  %205 = vmatprep.subr.bf16.mxu0 0
  %206 = vmatpush2.bf16.msra.mxu0 0
  %207 = vmatprep.subr.bf16.mxu0 0
  %208 = vmatpush2.bf16.msra.mxu0 0
  %209 = vmatprep.subr.bf16.mxu0 0
  %210 = vmatpush2.bf16.msra.mxu0 0
  %211 = vmatprep.subr.bf16.mxu0 0
  %212 = vmatpush2.bf16.msra.mxu0 0
  %213 = vmatprep.mubr.bf16.mxu0 0
  %214 = vmatmul.mubr.bf16.gmra.mxu0 %v176
  %v215 = vpop.f32.mrf.mxu0
  %v216 = vadd.f32 %v127, %v215
  %v217 = vpop.f32.mrf.mxu0
  %v218 = vpop.f32.mrf.mxu0
  %v219 = vadd.f32 %v130, %v218
  %v220 = vpop.f32.mrf.mxu0
  %221 = vmatprep.mubr.bf16.mxu0 0
  %222 = vmatmul.mubr.bf16.gmra.mxu0 %v179
  %v223 = vpop.f32.mrf.mxu0
  %v224 = vadd.f32 %v135, %v223
  %v225 = vpop.f32.mrf.mxu0
  %v226 = vpop.f32.mrf.mxu0
  %v227 = vadd.f32 %v138, %v226
  %v228 = vpop.f32.mrf.mxu0
  %229 = vdwg.mxu0
  %v230 = vld [vmem:[%s2] sm:$0xf]
  %v231 = vld [vmem:[%s2 + $0x4] sm:$0xf]
  %v232 = vld [vmem:[%s2 + $0x8] sm:$0xf]
  %v233 = vld [vmem:[%s2 + $0xc] sm:$0xf]
  %v234 = vld [vmem:[%s5] sm:$0xf]
  %v235 = vld [vmem:[%s5 + $0x4] sm:$0xf]
  %v240 = vunpack.c.l.b16 %v230
  %v241 = vunpack.c.l.b16 %v231
  %v242 = vunpack.c.l.b16 %v232
  %v243 = vunpack.c.l.b16 %v233
  %v244 = vpack.c.b16 %v241, %v240
  %v245 = vpack.c.b16 %v243, %v242
  %v248 = vunpack.c.l.b16 %v234
  %v249 = vunpack.c.l.b16 %v235
  %v250 = vpack.c.b16 %v249, %v248
  %vm252 = vcmask 130048
  %v254 = vsel %vm252, %v244, 0
  %v257 = vsel %vm252, %v245, 0
  %259 = vmatprep.subr.bf16.mxu0 0
  %260 = vmatpush1.bf16.msra.mxu0 0
  %261 = vmatprep.subr.bf16.mxu0 0
  %262 = vmatpush1.bf16.msra.mxu0 0
  %263 = vmatprep.subr.bf16.mxu0 0
  %264 = vmatpush1.bf16.msra.mxu0 0
  %265 = vmatprep.subr.bf16.mxu0 0
  %266 = vmatpush1.bf16.msra.mxu0 0
  %267 = vmatprep.subr.bf16.mxu0 0
  %268 = vmatpush1.bf16.msra.mxu0 0
  %269 = vmatprep.subr.bf16.mxu0 0
  %270 = vmatpush1.bf16.msra.mxu0 0
  %271 = vmatprep.subr.bf16.mxu0 0
  %272 = vmatpush1.bf16.msra.mxu0 0
  %273 = vmatprep.subr.bf16.mxu0 0
  %274 = vmatpush1.bf16.msra.mxu0 %v250
  %275 = vmatprep.subr.bf16.mxu0 0
  %276 = vmatpush2.bf16.msra.mxu0 0
  %277 = vmatprep.subr.bf16.mxu0 0
  %278 = vmatpush2.bf16.msra.mxu0 0
  %279 = vmatprep.subr.bf16.mxu0 0
  %280 = vmatpush2.bf16.msra.mxu0 0
  %281 = vmatprep.subr.bf16.mxu0 0
  %282 = vmatpush2.bf16.msra.mxu0 0
  %283 = vmatprep.subr.bf16.mxu0 0
  %284 = vmatpush2.bf16.msra.mxu0 0
  %285 = vmatprep.subr.bf16.mxu0 0
  %286 = vmatpush2.bf16.msra.mxu0 0
  %287 = vmatprep.subr.bf16.mxu0 0
  %288 = vmatpush2.bf16.msra.mxu0 0
  %289 = vmatprep.subr.bf16.mxu0 0
  %290 = vmatpush2.bf16.msra.mxu0 0
  %291 = vmatprep.mubr.bf16.mxu0 0
  %292 = vmatmul.mubr.bf16.gmra.mxu0 %v254
  %v293 = vpop.f32.mrf.mxu0
  %v294 = vadd.f32 0.0, %v293
  %v295 = vpop.f32.mrf.mxu0
  %v296 = vpop.f32.mrf.mxu0
  %v297 = vadd.f32 0.0, %v296
  %v298 = vpop.f32.mrf.mxu0
  %299 = vmatprep.mubr.bf16.mxu0 0
  %300 = vmatmul.mubr.bf16.gmra.mxu0 %v257
  %v301 = vpop.f32.mrf.mxu0
  %v302 = vadd.f32 0.0, %v301
  %v303 = vpop.f32.mrf.mxu0
  %v304 = vpop.f32.mrf.mxu0
  %v305 = vadd.f32 0.0, %v304
  %v306 = vpop.f32.mrf.mxu0
  %307 = vdwg.mxu0
  %v308 = vadd.f32 %v216, %v294
  %v309 = vadd.f32 %v219, %v297
  %v310 = vadd.f32 %v224, %v302
  %v311 = vadd.f32 %v227, %v305
  %v312 = vld [vmem:[%s6] sm:$0x1]
  %v314 = vlaneseq
  %v315 = vshrl.u32 %v314, 7
  %v316 = vsub.s32 0, %v315
  %v317 = vrot.slane %v312, %v316
  %v319 = vadd.f32 %v308, %v317
  %v320 = vadd.f32 %v309, %v317
  %v321 = vadd.f32 %v310, %v317
  %v322 = vadd.f32 %v311, %v317
  %v323 = vsub.f32 0.0, %v319
  %v324 = vsub.f32 0.0, %v320
  %v325 = vsub.f32 0.0, %v321
  %v326 = vsub.f32 0.0, %v322
  %v327 = vmul.f32 %v323, 1.442695
  %v328 = vpow.pop %v327
  %v329 = vmul.f32 %v324, 1.442695
  %v330 = vpow.pop %v329
  %v331 = vmul.f32 %v325, 1.442695
  %v332 = vpow.pop %v331
  %v333 = vmul.f32 %v326, 1.442695
  %v334 = vpow.pop %v333
  %v335 = vadd.f32 %v328, 1.0
  %v336 = vadd.f32 %v330, 1.0
  %v337 = vadd.f32 %v332, 1.0
  %v338 = vadd.f32 %v334, 1.0
  %v339 = vrcp.pop %v335
  %v340 = vrcp.pop %v336
  %v341 = vrcp.pop %v337
  %v342 = vrcp.pop %v338
  %v343 = vmax.f32 %v319, 0.0
  %v344 = vmax.f32 %v320, 0.0
  %v345 = vmax.f32 %v321, 0.0
  %v346 = vmax.f32 %v322, 0.0
  %v347 = vand.u32 2147483647, %v319
  %v348 = vand.u32 2147483647, %v320
  %v349 = vand.u32 2147483647, %v321
  %v350 = vand.u32 2147483647, %v322
  %v351 = vsub.f32 0.0, %v347
  %v352 = vsub.f32 0.0, %v348
  %v353 = vsub.f32 0.0, %v349
  %v354 = vsub.f32 0.0, %v350
  %v355 = vmul.f32 %v351, 1.442695
  %v356 = vpow.pop %v355
  %v357 = vmul.f32 %v352, 1.442695
  %v358 = vpow.pop %v357
  %v359 = vmul.f32 %v353, 1.442695
  %v360 = vpow.pop %v359
  %v361 = vmul.f32 %v354, 1.442695
  %v362 = vpow.pop %v361
  %v363 = vadd.f32 %v356, 1.0
  %v364 = vadd.f32 %v358, 1.0
  %v365 = vadd.f32 %v360, 1.0
  %v366 = vadd.f32 %v362, 1.0
  %v367 = vlog2.pop %v363
  %v368 = vmul.f32 %v367, 0.6931472
  %v369 = vlog2.pop %v364
  %v370 = vmul.f32 %v369, 0.6931472
  %v371 = vlog2.pop %v365
  %v372 = vmul.f32 %v371, 0.6931472
  %v373 = vlog2.pop %v366
  %v374 = vmul.f32 %v373, 0.6931472
  %v375 = vadd.f32 %v343, %v368
  %v376 = vadd.f32 %v344, %v370
  %v377 = vadd.f32 %v345, %v372
  %v378 = vadd.f32 %v346, %v374
  %383 = vrot.lane.b32.xlu0 %v375, 64
  %v384 = vpop.permute.xlu0 %383
  %385 = vrot.lane.b32.xlu0 %v376, 64
  %v386 = vpop.permute.xlu0 %385
  %387 = vrot.lane.b32.xlu0 %v377, 64
  %v388 = vpop.permute.xlu0 %387
  %389 = vrot.lane.b32.xlu0 %v378, 64
  %v390 = vpop.permute.xlu0 %389
  %v395 = vmul.f32 %v339, %v384
  %v396 = vmul.f32 %v340, %v386
  %v397 = vmul.f32 %v341, %v388
  %v398 = vmul.f32 %v342, %v390
  %399 = vst.msk [vmem:[%s7] sm:$0xff] %vm85, %v395
  %400 = vst.msk [vmem:[%s7 + $0x8] sm:$0xff] %vm85, %v396
  %401 = vst.msk [vmem:[%s7 + $0x10] sm:$0xff] %vm85, %v397
  %402 = vst.msk [vmem:[%s7 + $0x18] sm:$0xff] %vm85, %v398
  // Predicated region
  $region30: #{cgcnn_forward.12} parent=0 // pred_check
    _
  $region31: #{cgcnn_forward.12} parent=0 // pred_check_branch
    %404 = sbr.rel (0) target = $region33
  $region32: #{cgcnn_forward.12} parent=0 // pred_region
    _
  $region33: #{cgcnn_forward.12} parent=0 // pred_fallthru
    _
  // Predicated region
  $region34: #{cgcnn_forward.12} parent=0 // pred_check
    _
  $region35: #{cgcnn_forward.12} parent=0 // pred_check_branch
    %406 = sbr.rel (0) target = $region37
  $region36: #{cgcnn_forward.12} parent=0 // pred_region
    _
  $region37: #{cgcnn_forward.12} parent=0 // pred_fallthru
    _

// kernel: cgcnn_forward.21
$region0: #{cgcnn_forward.21}
  #allocation0 [shape = 'u32[]', space=smem, size = 0x4, offset = 0x4, fixed_abs, tag = 'smem constant byte address 0x4 - core index']
  #allocation1 [shape = 'u32[144,128]{1,0:T(1,128)}', space=vmem, size = 0x12000, scoped, tag = 'internal scratch']
  #allocation2 [shape = 'f32[1,1]{1,0:T(1,128)S(1)}', space=vmem, size = 0x200, scoped, tag = 'scoped memory for cgcnn_forward.21']
  %s0 = inlined_call_operand.vmem [shape: f32[2,64], index: 0, kind: input, shape index: {}]
  %s1 = inlined_call_operand.vmem [shape: bf16[64,128], index: 1, kind: input, shape index: {}]
  %s2 = inlined_call_operand.vmem [shape: f32[1,128], index: 2, kind: input, shape index: {}]
  %s3 = inlined_call_operand.vmem [shape: f32[1,128], index: 3, kind: input, shape index: {}]
  %s4 = inlined_call_operand.<no memory space> [shape: f32[1,1], index: 4, kind: input, shape index: {}]
  %s5 = inlined_call_operand.vmem [shape: f32[2,1], index: 5, kind: output, shape index: {}]
  %s6 = sld [smem:[#allocation0]]
  $region30: #{cgcnn_forward.21} parent=0
    _
  %s8 = ssub.s32 1, %s6
  %s9 = scalar_select 0, %s8, %s6
  %v10 = vstv %s4
  %11 = vst [vmem:[#allocation2] sm:$0x1] %v10
  // Predicated region
  $region2: #{cgcnn_forward.21} parent=0 // pred_check
    _
  $region3: #{cgcnn_forward.21} parent=0 // pred_check_branch
    %13 = sbr.rel (0) target = $region5
  $region4: #{cgcnn_forward.21} parent=0 // pred_region
    _
  $region5: #{cgcnn_forward.21} parent=0 // pred_fallthru
    _
  // Predicated region
  $region6: #{cgcnn_forward.21} parent=0 // pred_check
    _
  $region7: #{cgcnn_forward.21} parent=0 // pred_check_branch
    %15 = sbr.rel (0) target = $region9
  $region8: #{cgcnn_forward.21} parent=0 // pred_region
    _
  $region9: #{cgcnn_forward.21} parent=0 // pred_fallthru
    _
  // Predicated region
  $region10: #{cgcnn_forward.21} parent=0 // pred_check
    _
  $region11: #{cgcnn_forward.21} parent=0 // pred_check_branch
    %17 = sbr.rel (0) target = $region13
  $region12: #{cgcnn_forward.21} parent=0 // pred_region
    _
  $region13: #{cgcnn_forward.21} parent=0 // pred_fallthru
    _
  // Predicated region
  $region14: #{cgcnn_forward.21} parent=0 // pred_check
    _
  $region15: #{cgcnn_forward.21} parent=0 // pred_check_branch
    %19 = sbr.rel (0) target = $region17
  $region16: #{cgcnn_forward.21} parent=0 // pred_region
    _
  $region17: #{cgcnn_forward.21} parent=0 // pred_fallthru
    _
  // Predicated region
  $region18: #{cgcnn_forward.21} parent=0 // pred_check
    _
  $region19: #{cgcnn_forward.21} parent=0 // pred_check_branch
    %21 = sbr.rel (0) target = $region21
  $region20: #{cgcnn_forward.21} parent=0 // pred_region
    _
  $region21: #{cgcnn_forward.21} parent=0 // pred_fallthru
    _
  %v23 = vld [vmem:[%s0] sm:$0x3]
  %v24 = vmax.f32 %v23, 0.0
  %v25 = vand.u32 2147483647, %v23
  %v26 = vsub.f32 0.0, %v25
  %v27 = vmul.f32 %v26, 1.442695
  %v28 = vpow.pop %v27
  %v29 = vadd.f32 %v28, 1.0
  %v30 = vlog2.pop %v29
  %v31 = vmul.f32 %v30, 0.6931472
  %v32 = vadd.f32 %v24, %v31
  %v33 = vpack.c.bf16 %v32, %v32
  %v34 = vld [vmem:[%s1] sm:$0xf]
  %v35 = vld [vmem:[%s1 + $0x4] sm:$0xf]
  %v36 = vld [vmem:[%s1 + $0x8] sm:$0xf]
  %v37 = vld [vmem:[%s1 + $0xc] sm:$0xf]
  %v38 = vld [vmem:[%s1 + $0x10] sm:$0xf]
  %v39 = vld [vmem:[%s1 + $0x14] sm:$0xf]
  %v40 = vld [vmem:[%s1 + $0x18] sm:$0xf]
  %v41 = vld [vmem:[%s1 + $0x1c] sm:$0xf]
  %v42 = vld [vmem:[%s2] sm:$0x1]
  %v44 = vlaneseq
  %v45 = vshrl.u32 %v44, 7
  %v46 = vsub.s32 0, %v45
  %v47 = vrot.slane %v42, %v46
  %v57 = vunpack.c.l.b16 %v34
  %v58 = vunpack.c.l.b16 %v35
  %v59 = vunpack.c.l.b16 %v36
  %v60 = vunpack.c.l.b16 %v37
  %v61 = vunpack.c.l.b16 %v38
  %v62 = vunpack.c.l.b16 %v39
  %v63 = vunpack.c.l.b16 %v40
  %v64 = vunpack.c.l.b16 %v41
  %v65 = vpack.c.b16 %v58, %v57
  %v66 = vpack.c.b16 %v60, %v59
  %v67 = vpack.c.b16 %v62, %v61
  %v68 = vpack.c.b16 %v64, %v63
  %vm73 = vcmask 523264
  %v75 = vsel %vm73, %v33, 0
  %77 = vmatprep.subr.bf16.mxu0 0
  %78 = vmatpush1.bf16.msra.mxu0 0
  %79 = vmatprep.subr.bf16.mxu0 0
  %80 = vmatpush1.bf16.msra.mxu0 0
  %81 = vmatprep.subr.bf16.mxu0 0
  %82 = vmatpush1.bf16.msra.mxu0 0
  %83 = vmatprep.subr.bf16.mxu0 0
  %84 = vmatpush1.bf16.msra.mxu0 0
  %85 = vmatprep.subr.bf16.mxu0 0
  %86 = vmatpush1.bf16.msra.mxu0 %v68
  %87 = vmatprep.subr.bf16.mxu0 0
  %88 = vmatpush1.bf16.msra.mxu0 %v67
  %89 = vmatprep.subr.bf16.mxu0 0
  %90 = vmatpush1.bf16.msra.mxu0 %v66
  %91 = vmatprep.subr.bf16.mxu0 0
  %92 = vmatpush1.bf16.msra.mxu0 %v65
  %93 = vmatprep.subr.bf16.mxu0 0
  %94 = vmatpush2.bf16.msra.mxu0 0
  %95 = vmatprep.subr.bf16.mxu0 0
  %96 = vmatpush2.bf16.msra.mxu0 0
  %97 = vmatprep.subr.bf16.mxu0 0
  %98 = vmatpush2.bf16.msra.mxu0 0
  %99 = vmatprep.subr.bf16.mxu0 0
  %100 = vmatpush2.bf16.msra.mxu0 0
  %101 = vmatprep.subr.bf16.mxu0 0
  %102 = vmatpush2.bf16.msra.mxu0 0
  %103 = vmatprep.subr.bf16.mxu0 0
  %104 = vmatpush2.bf16.msra.mxu0 0
  %105 = vmatprep.subr.bf16.mxu0 0
  %106 = vmatpush2.bf16.msra.mxu0 0
  %107 = vmatprep.subr.bf16.mxu0 0
  %108 = vmatpush2.bf16.msra.mxu0 0
  %109 = vmatprep.mubr.bf16.mxu0 0
  %110 = vmatmul.mubr.bf16.gmra.mxu0 %v75
  %v111 = vpop.f32.mrf.mxu0
  %v112 = vadd.f32 %v47, %v111
  %v113 = vpop.f32.mrf.mxu0
  %v114 = vpop.f32.mrf.mxu0
  %v115 = vpop.f32.mrf.mxu0
  %116 = vdwg.mxu0
  %v117 = vmax.f32 %v112, 0.0
  %v118 = vand.u32 2147483647, %v112
  %v119 = vsub.f32 0.0, %v118
  %v120 = vmul.f32 %v119, 1.442695
  %v121 = vpow.pop %v120
  %v122 = vadd.f32 %v121, 1.0
  %v123 = vlog2.pop %v122
  %v124 = vmul.f32 %v123, 0.6931472
  %v125 = vadd.f32 %v117, %v124
  %v126 = vld [vmem:[%s3] sm:$0x1]
  %v128 = vlaneseq
  %v129 = vshrl.u32 %v128, 7
  %v130 = vsub.s32 0, %v129
  %v131 = vrot.slane %v126, %v130
  %v133 = vmul.f32 %v125, %v131
  %vm134 = vcmask 1041408
  %v135 = vsel %vm134, %v133, 0.0
  %136 = vadd.xlane.f32.xlu0 %v135
  %v137 = vpop.xlane.xlu0 %136
  %v138 = vld [vmem:[#allocation2] sm:$0x1]
  %v140 = vlaneseq
  %v141 = vshrl.u32 %v140, 7
  %v142 = vsub.s32 0, %v141
  %v143 = vrot.slane %v138, %v142
  %v145 = vadd.f32 %v137, %v143
  %vm146 = vcmask 1024
  %147 = vst.msk [vmem:[%s5] sm:$0x3] %vm146, %v145
  // Predicated region
  $region22: #{cgcnn_forward.21} parent=0 // pred_check
    _
  $region23: #{cgcnn_forward.21} parent=0 // pred_check_branch
    %149 = sbr.rel (0) target = $region25
  $region24: #{cgcnn_forward.21} parent=0 // pred_region
    _
  $region25: #{cgcnn_forward.21} parent=0 // pred_fallthru
    _
  // Predicated region
  $region26: #{cgcnn_forward.21} parent=0 // pred_check
    _
  $region27: #{cgcnn_forward.21} parent=0 // pred_check_branch
    %151 = sbr.rel (0) target = $region29
  $region28: #{cgcnn_forward.21} parent=0 // pred_region
    _
  $region29: #{cgcnn_forward.21} parent=0 // pred_fallthru
    _

</llo_original>
